<compile_context>
chip_gen: v7x
topology: tpu7x:2x2x1
jax: 0.10.0
libtpu: 0.0.40
codegen_flags: <defaults>
</compile_context>

<pallas_src>
import jax
import jax.numpy as jnp
from jax.experimental import pallas as pl
from jax.experimental.pallas import tpu as pltpu


def _round_up(n: int, m: int) -> int:
    return ((n + m - 1) // m) * m


def mlp_kernel(x_ref, w1_ref, w2_ref, o_ref):
    # Layer 1: MXU matmul with f32 accumulation, ReLU on the VPU in f32.
    h = jnp.dot(x_ref[...], w1_ref[...], preferred_element_type=jnp.float32)
    h = jnp.maximum(h, 0.0)
    # Layer 2: cast activations back to the operand dtype only to feed the
    # MXU; accumulate in f32, ReLU in f32, single cast at the store.
    out = jnp.dot(h.astype(w2_ref.dtype), w2_ref[...],
                  preferred_element_type=jnp.float32)
    out = jnp.maximum(out, 0.0)
    o_ref[...] = out.astype(o_ref.dtype)


def nn_model_forward(x, w1, w2, *, tb=None, operand_dtype=jnp.bfloat16):
    """2-layer MLP forward (matmul->relu->matmul->relu) as one Pallas kernel.

    The 1-D grid tiles the batch; both weight matrices are VMEM-resident
    (same block every grid step).  Feature dims are passed at their natural
    size (full-dim blocks satisfy the (8,128) layout rule); only the batch is
    zero-padded to a multiple of the tile and stripped before returning.
    """
    B, n_input = x.shape
    n_in_w, n_hidden = w1.shape
    n_hidden2, n_output = w2.shape
    assert n_in_w == n_input and n_hidden2 == n_hidden

    out_dtype = x.dtype
    if operand_dtype is None:
        operand_dtype = x.dtype

    # Batch tile: multiple of 8 sublanes, <=512 rows, and >=2 grid steps when
    # the batch allows it (pipelining + both v7x TensorCores get work).
    if tb is None:
        tb = min(512, _round_up(B, 8))
        if B > 8 and _round_up(B, 8) // tb < 2:
            tb = max(8, _round_up(_round_up(B, 8) // 2, 8))
    tb = max(8, _round_up(int(tb), 8))
    B_pad = _round_up(B, tb)
    grid = (B_pad // tb,)

    # Pad only the batch; cast operands once at the wrapper boundary.
    xp = x.astype(operand_dtype)
    if B_pad != B:
        xp = jnp.pad(xp, ((0, B_pad - B), (0, 0)))
    w1p = w1.astype(operand_dtype)
    w2p = w2.astype(operand_dtype)

    op_bytes = jnp.dtype(operand_dtype).itemsize
    out_bytes = jnp.dtype(out_dtype).itemsize

    # VMEM budget: double-buffered x/out tiles + (conservatively counted as
    # double-buffered) resident weights + f32 intermediates, plus slack.
    # Capped at v7x's 64 MiB so the same config is portable across chips.
    vmem_needed = (
        2 * tb * n_input * op_bytes            # x tiles (double buffered)
        + 2 * tb * n_output * out_bytes        # out tiles (double buffered)
        + 2 * n_input * n_hidden * op_bytes    # W1 (resident)
        + 2 * n_hidden * n_output * op_bytes   # W2 (resident)
        + tb * n_hidden * 4 + tb * n_output * 4  # f32 intermediates
    )
    vmem_limit = min(max(vmem_needed + (8 << 20), 32 << 20), 64 << 20)

    flops = 2 * B_pad * n_input * n_hidden + 2 * B_pad * n_hidden * n_output
    bytes_accessed = (B_pad * n_input * op_bytes
                      + n_input * n_hidden * op_bytes
                      + n_hidden * n_output * op_bytes
                      + B_pad * n_output * out_bytes)

    out_padded = pl.pallas_call(
        mlp_kernel,
        out_shape=jax.ShapeDtypeStruct((B_pad, n_output), out_dtype),
        grid_spec=pltpu.PrefetchScalarGridSpec(
            num_scalar_prefetch=0,
            grid=grid,
            in_specs=[
                pl.BlockSpec((tb, n_input), lambda i: (i, 0)),
                pl.BlockSpec((n_input, n_hidden), lambda i: (0, 0)),
                pl.BlockSpec((n_hidden, n_output), lambda i: (0, 0)),
            ],
            out_specs=pl.BlockSpec((tb, n_output), lambda i: (i, 0)),
        ),
        compiler_params=pltpu.CompilerParams(
            dimension_semantics=("parallel",),
            vmem_limit_bytes=int(vmem_limit)),
        cost_estimate=pl.CostEstimate(
            flops=flops, transcendentals=0, bytes_accessed=bytes_accessed),
    )(xp, w1p, w2p)

    # Strip the batch padding (feature dims were never padded).
    if B_pad != B:
        out_padded = out_padded[:B]
    return out_padded


if __name__ == "__main__":
    # Shapes consistent with the module: n_input=32, n_hidden=128 (default),
    # n_output=32.  Batch 256 gives the grid 2 steps so pipelining /
    # core-parallelism is actually exercised.
    B, n_input, n_hidden, n_output = 256, 32, 128, 32

    key = jax.random.PRNGKey(0)
    kx, k1, k2 = jax.random.split(key, 3)

    # torch.randn -> standard normal init, deterministic here via PRNGKey(0).
    x = jax.random.normal(kx, (B, n_input), dtype=jnp.float32)
    w1 = jax.random.normal(k1, (n_input, n_hidden), dtype=jnp.float32)
    w2 = jax.random.normal(k2, (n_hidden, n_output), dtype=jnp.float32)

    out = jax.block_until_ready(nn_model_forward(x, w1, w2))
    assert out.shape == (B, n_output)
    assert out.dtype == x.dtype

    # Reference with the same bf16-operand / f32-accumulate numerics as the
    # kernel (tight tolerance).
    bf = jnp.bfloat16
    h_ref = jnp.maximum(
        jnp.dot(x.astype(bf), w1.astype(bf), preferred_element_type=jnp.float32), 0.0)
    ref_bf = jnp.maximum(
        jnp.dot(h_ref.astype(bf), w2.astype(bf), preferred_element_type=jnp.float32), 0.0)
    assert jnp.allclose(out, ref_bf, atol=1e-2, rtol=1e-2), "mismatch vs bf16 reference"

    # Loose sanity check against the exact f32 torch semantics (bf16 operand
    # rounding only).
    ref_f32 = jnp.maximum(jnp.maximum(x @ w1, 0.0) @ w2, 0.0)
    assert jnp.allclose(out, ref_f32, atol=2.0, rtol=5e-2), "mismatch vs f32 reference"

    print("KERNEL_OK")
</pallas_src>

<mosaic_0001>
module attributes {stable_mosaic.version = 11 : i64} {
  func.func @mlp_kernel(%arg0: i32, %arg1: memref<128x32xbf16, #tpu.memory_space<vmem>>, %arg2: memref<32x128xbf16, #tpu.memory_space<vmem>>, %arg3: memref<128x32xbf16, #tpu.memory_space<vmem>>, %arg4: memref<128x32xf32, #tpu.memory_space<vmem>>) attributes {dimension_semantics = [#tpu.dimension_semantics<parallel>], iteration_bounds = array<i64: 2>, scalar_prefetch = 0 : i64, scratch_operands = 0 : i64, tpu.core_type = #tpu.core_type<tc>, window_params = [{transform_indices = @transform_0, window_bounds = array<i64: 128, 32>}, {pipeline_mode = #tpu.pipeline_mode<synchronous>, transform_indices = @transform_1, window_bounds = array<i64: 32, 128>}, {pipeline_mode = #tpu.pipeline_mode<synchronous>, transform_indices = @transform_2, window_bounds = array<i64: 128, 32>}, {transform_indices = @transform_3, window_bounds = array<i64: 128, 32>}]} {
    %c0 = arith.constant 0 : index
    %c0_0 = arith.constant 0 : index
    %0 = vector.load %arg1[%c0, %c0_0] : memref<128x32xbf16, #tpu.memory_space<vmem>>, vector<128x32xbf16>
    %c0_1 = arith.constant 0 : index
    %c0_2 = arith.constant 0 : index
    %1 = vector.load %arg2[%c0_1, %c0_2] : memref<32x128xbf16, #tpu.memory_space<vmem>>, vector<32x128xbf16>
    %cst = arith.constant dense<0.000000e+00> : vector<128x128xf32>
    %2 = tpu.matmul %0, %1, %cst {dimension_numbers = #tpu.dot_dimension_numbers<[1], [0], [0], [1], [0, 0, 1, 1], [], []>} : vector<128x32xbf16>, vector<32x128xbf16>, vector<128x128xf32> -> vector<128x128xf32>
    %cst_3 = arith.constant 0.000000e+00 : f32
    %3 = vector.broadcast %cst_3 : f32 to vector<128x128xf32>
    %4 = arith.maximumf %2, %3 : vector<128x128xf32>
    %5 = arith.truncf %4 : vector<128x128xf32> to vector<128x128xbf16>
    %c0_4 = arith.constant 0 : index
    %c0_5 = arith.constant 0 : index
    %6 = vector.load %arg3[%c0_4, %c0_5] : memref<128x32xbf16, #tpu.memory_space<vmem>>, vector<128x32xbf16>
    %cst_6 = arith.constant dense<0.000000e+00> : vector<128x32xf32>
    %7 = tpu.matmul %5, %6, %cst_6 {dimension_numbers = #tpu.dot_dimension_numbers<[1], [0], [0], [1], [0, 0, 1, 1], [], []>} : vector<128x128xbf16>, vector<128x32xbf16>, vector<128x32xf32> -> vector<128x32xf32>
    %cst_7 = arith.constant 0.000000e+00 : f32
    %8 = vector.broadcast %cst_7 : f32 to vector<128x32xf32>
    %9 = arith.maximumf %7, %8 : vector<128x32xf32>
    %c0_8 = arith.constant 0 : index
    %c0_9 = arith.constant 0 : index
    %10 = vector.load %arg4[%c0_8, %c0_9] : memref<128x32xf32, #tpu.memory_space<vmem>>, vector<128x32xf32>
    tpu.vector_store %arg4[%c0_8, %c0_9], %9 {strides = array<i32>} : memref<128x32xf32, #tpu.memory_space<vmem>>, vector<128x32xf32>,
    return
  }
  func.func @transform_0(%arg0: i32) -> (i32, i32) {
    %c0_i32 = arith.constant 0 : i32
    %c0_i32_0 = arith.constant 0 : i32
    return %arg0, %c0_i32 : i32, i32
  }
  func.func @transform_1(%arg0: i32) -> (i32, i32) {
    %c0_i32 = arith.constant 0 : i32
    %c0_i32_0 = arith.constant 0 : i32
    %c0_i32_1 = arith.constant 0 : i32
    return %c0_i32, %c0_i32_0 : i32, i32
  }
  func.func @transform_2(%arg0: i32) -> (i32, i32) {
    %c0_i32 = arith.constant 0 : i32
    %c0_i32_0 = arith.constant 0 : i32
    %c0_i32_1 = arith.constant 0 : i32
    return %c0_i32, %c0_i32_0 : i32, i32
  }
  func.func @transform_3(%arg0: i32) -> (i32, i32) {
    %c0_i32 = arith.constant 0 : i32
    %c0_i32_0 = arith.constant 0 : i32
    return %arg0, %c0_i32 : i32, i32
  }
}

</mosaic_0001>

<llo_original>
// kernel: tpu_custom_call.1
$region0: #{tpu_custom_call.1}
  #allocation0 [shape = 'u32[]', space=smem, size = 0x4, offset = 0x4, fixed_abs, tag = 'smem constant byte address 0x4 - core index']
  #allocation1 [shape = 'u32[144,128]{1,0:T(1,128)}', space=vmem, size = 0x12000, scoped, tag = 'internal scratch']
  %s0 = inlined_call_operand.vmem [shape: bf16[256,32], index: 0, kind: input, shape index: {}]
  %s1 = inlined_call_operand.vmem [shape: bf16[32,128], index: 1, kind: input, shape index: {}]
  %s2 = inlined_call_operand.vmem [shape: bf16[128,32], index: 2, kind: input, shape index: {}]
  %s3 = inlined_call_operand.vmem [shape: f32[256,32], index: 3, kind: output, shape index: {}]
  %s4 = sld [smem:[#allocation0]]
  $region45: #{tpu_custom_call.1} parent=0
    _
  %s6 = ssub.s32 1, %s4
  %s7 = scalar_select 0, %s6, %s4
  loop: start=0, step=1, limit=4
  $region2: #{tpu_custom_call.1} parent=0 // loop_pre_header
    _
  $region3: #{tpu_custom_call.1} parent=0 // loop_header
    %s9 = sphi 0, %s13
    %p10 = scmp.ge.s32.totalorder %s9, 4
    %s19 = sphi 0, %s21
    %s22 = sphi 0, %s19
    %s23 = sphi 0, %s22
    %s39 = sphi 0, %s23
    %s43 = sphi 0, %s43
    %s45 = sphi 0, %s43
    %s46 = sphi 0, %s45
    %s60 = sphi 0, %s46
    %s64 = sphi 0, %s64
    %s66 = sphi 0, %s64
    %s67 = sphi 0, %s66
    %s81 = sphi 0, %s67
    %s87 = sphi 0, %s89
    %s90 = sphi 0, %s87
    %s91 = sphi 0, %s90
    %s107 = sphi 0, %s91
  $region4: #{tpu_custom_call.1} parent=0 // loop_header_branch
    %12 = sbr.rel (%p10) target = $region8
  $region5: #{tpu_custom_call.1} parent=0 // loop_body
    %s14 = ssub.s32 %s9, 1
    %s15 = ssub.s32 %s9, 2
    %s16 = sadd.s32 %s9, 1
    %s17 = ssub.s32 %s9, %s16
    %p18 = scmp.eq.s32.totalorder %s17, 0
    %s20 = sadd.s32 %s19, 1
    %s21 = scalar_select %p18, %s19, %s20
    %p24 = pneg %p18
    %p25 = scmp.eq.s32.totalorder %s9, 1
    %p26 = por %p24, %p25
    %p27 = scmp.ne.s32.totalorder %s19, %s22
    %p28 = scmp.eq.s32.totalorder %s9, 0
    %p29 = por %p27, %p28
    %p30 = scmp.ne.s32.totalorder %s19, %s22
    %p31 = scmp.eq.s32.totalorder %s14, 1
    %p32 = por %p30, %p31
    %p33 = scmp.ne.s32.totalorder %s22, %s23
    %p34 = scmp.eq.s32.totalorder %s14, 0
    %p35 = por %p33, %p34
    %p36 = scmp.ne.s32.totalorder %s22, %s23
    %p37 = scmp.eq.s32.totalorder %s15, 1
    %p38 = por %p36, %p37
    %p40 = scmp.ne.s32.totalorder %s23, %s39
    %p41 = scmp.eq.s32.totalorder %s15, 0
    %p42 = por %p40, %p41
    %s44 = sadd.s32 %s43, 1
    %p47 = scmp.eq.s32.totalorder %s9, 1
    %p48 = scmp.ne.s32.totalorder %s43, %s45
    %p49 = scmp.eq.s32.totalorder %s9, 0
    %p50 = por %p48, %p49
    %p51 = scmp.ne.s32.totalorder %s43, %s45
    %p52 = scmp.eq.s32.totalorder %s14, 1
    %p53 = por %p51, %p52
    %p54 = scmp.ne.s32.totalorder %s45, %s46
    %p55 = scmp.eq.s32.totalorder %s14, 0
    %p56 = por %p54, %p55
    %p57 = scmp.ne.s32.totalorder %s45, %s46
    %p58 = scmp.eq.s32.totalorder %s15, 1
    %p59 = por %p57, %p58
    %p61 = scmp.ne.s32.totalorder %s46, %s60
    %p62 = scmp.eq.s32.totalorder %s15, 0
    %p63 = por %p61, %p62
    %s65 = sadd.s32 %s64, 1
    %p68 = scmp.eq.s32.totalorder %s9, 1
    %p69 = scmp.ne.s32.totalorder %s64, %s66
    %p70 = scmp.eq.s32.totalorder %s9, 0
    %p71 = por %p69, %p70
    %p72 = scmp.ne.s32.totalorder %s64, %s66
    %p73 = scmp.eq.s32.totalorder %s14, 1
    %p74 = por %p72, %p73
    %p75 = scmp.ne.s32.totalorder %s66, %s67
    %p76 = scmp.eq.s32.totalorder %s14, 0
    %p77 = por %p75, %p76
    %p78 = scmp.ne.s32.totalorder %s66, %s67
    %p79 = scmp.eq.s32.totalorder %s15, 1
    %p80 = por %p78, %p79
    %p82 = scmp.ne.s32.totalorder %s67, %s81
    %p83 = scmp.eq.s32.totalorder %s15, 0
    %p84 = por %p82, %p83
    %s85 = ssub.s32 %s9, %s16
    %p86 = scmp.eq.s32.totalorder %s85, 0
    %s88 = sadd.s32 %s87, 1
    %s89 = scalar_select %p86, %s87, %s88
    %p92 = pneg %p86
    %p93 = scmp.eq.s32.totalorder %s9, 1
    %p94 = por %p92, %p93
    %p95 = scmp.ne.s32.totalorder %s87, %s90
    %p96 = scmp.eq.s32.totalorder %s9, 0
    %p97 = por %p95, %p96
    %p98 = scmp.ne.s32.totalorder %s87, %s90
    %p99 = scmp.eq.s32.totalorder %s14, 1
    %p100 = por %p98, %p99
    %p101 = scmp.ne.s32.totalorder %s90, %s91
    %p102 = scmp.eq.s32.totalorder %s14, 0
    %p103 = por %p101, %p102
    %p104 = scmp.ne.s32.totalorder %s90, %s91
    %p105 = scmp.eq.s32.totalorder %s15, 1
    %p106 = por %p104, %p105
    %p108 = scmp.ne.s32.totalorder %s91, %s107
    %p109 = scmp.eq.s32.totalorder %s15, 0
    %p110 = por %p108, %p109
    %p111 = scmp.le.s32.totalorder 1, %s9
    %p112 = scmp.lt.s32.totalorder %s9, 3
    %p113 = pnand %p111, %p112
    %p114 = pneg %p113
    // Predicated region
    $region9: #{tpu_custom_call.1} parent=5 // pred_check
      _
    $region10: #{tpu_custom_call.1} parent=5 // pred_check_branch
      %116 = sbr.rel (%p113) target = $region12
    $region11: #{tpu_custom_call.1} parent=5 // pred_region
      %s117 = ssub.s32 %s9, 1
      // Predicated region
      $region13: #{tpu_custom_call.1} parent=11 // pred_check
        %p118 = pneg %p56
      $region14: #{tpu_custom_call.1} parent=11 // pred_check_branch
        %120 = sbr.rel (%p118) target = $region16
      $region15: #{tpu_custom_call.1} parent=11 // pred_region
        _
      $region16: #{tpu_custom_call.1} parent=11 // pred_fallthru
        _
      // Predicated region
      $region17: #{tpu_custom_call.1} parent=11 // pred_check
        %p121 = pneg %p77
      $region18: #{tpu_custom_call.1} parent=11 // pred_check_branch
        %123 = sbr.rel (%p121) target = $region20
      $region19: #{tpu_custom_call.1} parent=11 // pred_region
        _
      $region20: #{tpu_custom_call.1} parent=11 // pred_fallthru
        _
    $region12: #{tpu_custom_call.1} parent=5 // pred_fallthru
      _
    %p124 = scmp.lt.s32.totalorder %s9, 2
    // Predicated region
    $region21: #{tpu_custom_call.1} parent=5 // pred_check
      %p125 = pneg %p124
    $region22: #{tpu_custom_call.1} parent=5 // pred_check_branch
      %127 = sbr.rel (%p125) target = $region24
    $region23: #{tpu_custom_call.1} parent=5 // pred_region
      // Predicated region
      $region25: #{tpu_custom_call.1} parent=23 // pred_check
        %p128 = pneg %p29
      $region26: #{tpu_custom_call.1} parent=23 // pred_check_branch
        %130 = sbr.rel (%p128) target = $region28
      $region27: #{tpu_custom_call.1} parent=23 // pred_region
        %s131 = smul.u32 16, %s9
        %p132 = scmp.lt.s32.totalorder %s131, 31
        %s133 = scalar_select %p132, %s131, 31
        %s134 = smul.addr %s133, 4
        %s135 = scalar_lea.vmem %s0, %s134
        %s136 = smul.u32 16, %s9
      $region28: #{tpu_custom_call.1} parent=23 // pred_fallthru
        _
    $region24: #{tpu_custom_call.1} parent=5 // pred_fallthru
      _
    %p137 = scmp.le.s32.totalorder 1, %s9
    %p138 = scmp.lt.s32.totalorder %s9, 3
    %p139 = pnand %p137, %p138
    %p140 = pneg %p139
    // Predicated region
    $region29: #{tpu_custom_call.1} parent=5 // pred_check
      _
    $region30: #{tpu_custom_call.1} parent=5 // pred_check_branch
      %142 = sbr.rel (%p139) target = $region32
    $region31: #{tpu_custom_call.1} parent=5 // pred_region
      %s143 = ssub.s32 %s9, 1
      %s144 = smul.u32 16, %s14
      %p145 = scmp.lt.s32.totalorder %s144, 31
      %s146 = scalar_select %p145, %s144, 31
      %s147 = smul.addr %s146, 4
      %s148 = scalar_lea.vmem %s0, %s147
      %p149 = pneg %p35
      %p150 = pneg %p32
      %p151 = pneg %p56
      %p152 = pneg %p53
      %p153 = pneg %p77
      %p154 = pneg %p74
      %p155 = pneg %p103
      %p156 = pneg %p100
      %s157 = smul.u32 16, %s14
      %p158 = scmp.lt.s32.totalorder %s157, 31
      %s159 = scalar_select %p158, %s157, 31
      %s160 = smul.addr %s159, 8
      %s161 = scalar_lea.vmem %s3, %s160
      %s162 = smul.u32 16, %s14
      %p163 = scmp.lt.s32.totalorder %s162, 31
      %s164 = scalar_select %p163, %s162, 31
      %s165 = smul.addr %s164, 4
      %s166 = scalar_lea.vmem %s0, %s165
      %s167 = smul.u32 16, %s14
      %s168 = smul.u32 16, %s14
      %p169 = scmp.lt.s32.totalorder %s168, 31
      %s170 = scalar_select %p169, %s168, 31
      %s171 = smul.addr %s170, 8
      %s172 = scalar_lea.vmem %s3, %s171
      %s173 = smul.u32 16, %s14
      %v175 = vld [vmem:[%s166] sm:$0xf]
      %v176 = vld [vmem:[%s166 + $0x4] sm:$0xf]
      %v177 = vld [vmem:[%s166 + $0x8] sm:$0xf]
      %v178 = vld [vmem:[%s166 + $0xc] sm:$0xf]
      %v179 = vld [vmem:[%s166 + $0x10] sm:$0xf]
      %v180 = vld [vmem:[%s166 + $0x14] sm:$0xf]
      %v181 = vld [vmem:[%s166 + $0x18] sm:$0xf]
      %v182 = vld [vmem:[%s166 + $0x1c] sm:$0xf]
      %v183 = vld [vmem:[%s166 + $0x20] sm:$0xf]
      %v184 = vld [vmem:[%s166 + $0x24] sm:$0xf]
      %v185 = vld [vmem:[%s166 + $0x28] sm:$0xf]
      %v186 = vld [vmem:[%s166 + $0x2c] sm:$0xf]
      %v187 = vld [vmem:[%s166 + $0x30] sm:$0xf]
      %v188 = vld [vmem:[%s166 + $0x34] sm:$0xf]
      %v189 = vld [vmem:[%s166 + $0x38] sm:$0xf]
      %v190 = vld [vmem:[%s166 + $0x3c] sm:$0xf]
      %v191 = vld [vmem:[%s1] sm:$0xf]
      %v192 = vld [vmem:[%s1 + $0x4] sm:$0xf]
      %v193 = vld [vmem:[%s1 + $0x8] sm:$0xf]
      %v194 = vld [vmem:[%s1 + $0xc] sm:$0xf]
      %v211 = vunpack.c.l.b16 %v175
      %v212 = vunpack.c.l.b16 %v176
      %v213 = vunpack.c.l.b16 %v177
      %v214 = vunpack.c.l.b16 %v178
      %v215 = vunpack.c.l.b16 %v179
      %v216 = vunpack.c.l.b16 %v180
      %v217 = vunpack.c.l.b16 %v181
      %v218 = vunpack.c.l.b16 %v182
      %v219 = vunpack.c.l.b16 %v183
      %v220 = vunpack.c.l.b16 %v184
      %v221 = vunpack.c.l.b16 %v185
      %v222 = vunpack.c.l.b16 %v186
      %v223 = vunpack.c.l.b16 %v187
      %v224 = vunpack.c.l.b16 %v188
      %v225 = vunpack.c.l.b16 %v189
      %v226 = vunpack.c.l.b16 %v190
      %v227 = vpack.c.b16 %v212, %v211
      %v228 = vpack.c.b16 %v214, %v213
      %v229 = vpack.c.b16 %v216, %v215
      %v230 = vpack.c.b16 %v218, %v217
      %v231 = vpack.c.b16 %v220, %v219
      %v232 = vpack.c.b16 %v222, %v221
      %v233 = vpack.c.b16 %v224, %v223
      %v234 = vpack.c.b16 %v226, %v225
      %v239 = vunpack.c.l.b16 %v191
      %v240 = vunpack.c.l.b16 %v192
      %v241 = vunpack.c.l.b16 %v193
      %v242 = vunpack.c.l.b16 %v194
      %v243 = vpack.c.b16 %v240, %v239
      %v244 = vpack.c.b16 %v242, %v241
      %vm247 = vcmask 261120
      %v249 = vsel %vm247, %v227, 0
      %v252 = vsel %vm247, %v228, 0
      %v255 = vsel %vm247, %v229, 0
      %v258 = vsel %vm247, %v230, 0
      %v261 = vsel %vm247, %v231, 0
      %v264 = vsel %vm247, %v232, 0
      %v267 = vsel %vm247, %v233, 0
      %v270 = vsel %vm247, %v234, 0
      %272 = vmatprep.subr.bf16.mxu0 0
      %273 = vmatpush1.bf16.msra.mxu0 %v243
      %274 = vmatprep.subr.bf16.mxu0 0
      %275 = vmatpush1.bf16.msra.mxu0 %v244
      %276 = vmatprep.subr.bf16.mxu0 0
      %277 = vmatpush1.bf16.msra.mxu0 0
      %278 = vmatprep.subr.bf16.mxu0 0
      %279 = vmatpush1.bf16.msra.mxu0 0
      %280 = vmatprep.subr.bf16.mxu0 0
      %281 = vmatpush1.bf16.msra.mxu0 0
      %282 = vmatprep.subr.bf16.mxu0 0
      %283 = vmatpush1.bf16.msra.mxu0 0
      %284 = vmatprep.subr.bf16.mxu0 0
      %285 = vmatpush1.bf16.msra.mxu0 0
      %286 = vmatprep.subr.bf16.mxu0 0
      %287 = vmatpush1.bf16.msra.mxu0 0
      %288 = vmatprep.subr.bf16.mxu0 0
      %289 = vmatpush1.bf16.msra.mxu0 0
      %290 = vmatprep.subr.bf16.mxu0 0
      %291 = vmatpush1.bf16.msra.mxu0 0
      %292 = vmatprep.subr.bf16.mxu0 0
      %293 = vmatpush1.bf16.msra.mxu0 0
      %294 = vmatprep.subr.bf16.mxu0 0
      %295 = vmatpush1.bf16.msra.mxu0 0
      %296 = vmatprep.subr.bf16.mxu0 0
      %297 = vmatpush1.bf16.msra.mxu0 0
      %298 = vmatprep.subr.bf16.mxu0 0
      %299 = vmatpush1.bf16.msra.mxu0 0
      %300 = vmatprep.subr.bf16.mxu0 0
      %301 = vmatpush1.bf16.msra.mxu0 0
      %302 = vmatprep.subr.bf16.mxu0 0
      %303 = vmatpush1.bf16.msra.mxu0 0
      %304 = vmatprep.mubr.bf16.mxu0 0
      %305 = vmatmul.mubr.bf16.gmra.mrb[0].mxu0 %v249
      %v306 = vpop.f32.mrb[0].mxu0
      %v307 = vadd.f32 0.0, %v306
      %v308 = vpop.f32.mrb[0].mxu0
      %v309 = vpop.f32.mrb[0].mxu0
      %v310 = vadd.f32 0.0, %v309
      %v311 = vpop.f32.mrb[0].mxu0
      %312 = vmatprep.mubr.bf16.mxu0 0
      %313 = vmatmul.mubr.bf16.gmra.mrb[0].mxu0 %v252
      %v314 = vpop.f32.mrb[0].mxu0
      %v315 = vadd.f32 0.0, %v314
      %v316 = vpop.f32.mrb[0].mxu0
      %v317 = vpop.f32.mrb[0].mxu0
      %v318 = vadd.f32 0.0, %v317
      %v319 = vpop.f32.mrb[0].mxu0
      %320 = vmatprep.mubr.bf16.mxu0 0
      %321 = vmatmul.mubr.bf16.gmra.mrb[0].mxu0 %v255
      %v322 = vpop.f32.mrb[0].mxu0
      %v323 = vadd.f32 0.0, %v322
      %v324 = vpop.f32.mrb[0].mxu0
      %v325 = vpop.f32.mrb[0].mxu0
      %v326 = vadd.f32 0.0, %v325
      %v327 = vpop.f32.mrb[0].mxu0
      %328 = vmatprep.mubr.bf16.mxu0 0
      %329 = vmatmul.mubr.bf16.gmra.mrb[0].mxu0 %v258
      %v330 = vpop.f32.mrb[0].mxu0
      %v331 = vadd.f32 0.0, %v330
      %v332 = vpop.f32.mrb[0].mxu0
      %v333 = vpop.f32.mrb[0].mxu0
      %v334 = vadd.f32 0.0, %v333
      %v335 = vpop.f32.mrb[0].mxu0
      %336 = vmatprep.mubr.bf16.mxu0 0
      %337 = vmatmul.mubr.bf16.gmra.mrb[0].mxu0 %v261
      %v338 = vpop.f32.mrb[0].mxu0
      %v339 = vadd.f32 0.0, %v338
      %v340 = vpop.f32.mrb[0].mxu0
      %v341 = vpop.f32.mrb[0].mxu0
      %v342 = vadd.f32 0.0, %v341
      %v343 = vpop.f32.mrb[0].mxu0
      %344 = vmatprep.mubr.bf16.mxu0 0
      %345 = vmatmul.mubr.bf16.gmra.mrb[0].mxu0 %v264
      %v346 = vpop.f32.mrb[0].mxu0
      %v347 = vadd.f32 0.0, %v346
      %v348 = vpop.f32.mrb[0].mxu0
      %v349 = vpop.f32.mrb[0].mxu0
      %v350 = vadd.f32 0.0, %v349
      %v351 = vpop.f32.mrb[0].mxu0
      %352 = vmatprep.mubr.bf16.mxu0 0
      %353 = vmatmul.mubr.bf16.gmra.mrb[0].mxu0 %v267
      %v354 = vpop.f32.mrb[0].mxu0
      %v355 = vadd.f32 0.0, %v354
      %v356 = vpop.f32.mrb[0].mxu0
      %v357 = vpop.f32.mrb[0].mxu0
      %v358 = vadd.f32 0.0, %v357
      %v359 = vpop.f32.mrb[0].mxu0
      %360 = vmatprep.mubr.bf16.mxu0 0
      %361 = vmatmul.mubr.bf16.gmra.mrb[0].mxu0 %v270
      %v362 = vpop.f32.mrb[0].mxu0
      %v363 = vadd.f32 0.0, %v362
      %v364 = vpop.f32.mrb[0].mxu0
      %v365 = vpop.f32.mrb[0].mxu0
      %v366 = vadd.f32 0.0, %v365
      %v367 = vpop.f32.mrb[0].mxu0
      %368 = vdwg.mxu0
      %v369 = vmax.f32 %v307, 0.0
      %v370 = vmax.f32 %v310, 0.0
      %v371 = vmax.f32 %v315, 0.0
      %v372 = vmax.f32 %v318, 0.0
      %v373 = vmax.f32 %v323, 0.0
      %v374 = vmax.f32 %v326, 0.0
      %v375 = vmax.f32 %v331, 0.0
      %v376 = vmax.f32 %v334, 0.0
      %v377 = vmax.f32 %v339, 0.0
      %v378 = vmax.f32 %v342, 0.0
      %v379 = vmax.f32 %v347, 0.0
      %v380 = vmax.f32 %v350, 0.0
      %v381 = vmax.f32 %v355, 0.0
      %v382 = vmax.f32 %v358, 0.0
      %v383 = vmax.f32 %v363, 0.0
      %v384 = vmax.f32 %v366, 0.0
      %v385 = vpack.c.bf16 %v370, %v369
      %v386 = vpack.c.bf16 %v372, %v371
      %v387 = vpack.c.bf16 %v374, %v373
      %v388 = vpack.c.bf16 %v376, %v375
      %v389 = vpack.c.bf16 %v378, %v377
      %v390 = vpack.c.bf16 %v380, %v379
      %v391 = vpack.c.bf16 %v382, %v381
      %v392 = vpack.c.bf16 %v384, %v383
      %v393 = vld [vmem:[%s2] sm:$0xf]
      %v394 = vld [vmem:[%s2 + $0x4] sm:$0xf]
      %v395 = vld [vmem:[%s2 + $0x8] sm:$0xf]
      %v396 = vld [vmem:[%s2 + $0xc] sm:$0xf]
      %v397 = vld [vmem:[%s2 + $0x10] sm:$0xf]
      %v398 = vld [vmem:[%s2 + $0x14] sm:$0xf]
      %v399 = vld [vmem:[%s2 + $0x18] sm:$0xf]
      %v400 = vld [vmem:[%s2 + $0x1c] sm:$0xf]
      %v401 = vld [vmem:[%s2 + $0x20] sm:$0xf]
      %v402 = vld [vmem:[%s2 + $0x24] sm:$0xf]
      %v403 = vld [vmem:[%s2 + $0x28] sm:$0xf]
      %v404 = vld [vmem:[%s2 + $0x2c] sm:$0xf]
      %v405 = vld [vmem:[%s2 + $0x30] sm:$0xf]
      %v406 = vld [vmem:[%s2 + $0x34] sm:$0xf]
      %v407 = vld [vmem:[%s2 + $0x38] sm:$0xf]
      %v408 = vld [vmem:[%s2 + $0x3c] sm:$0xf]
      %v425 = vunpack.c.l.b16 %v393
      %v426 = vunpack.c.l.b16 %v394
      %v427 = vunpack.c.l.b16 %v395
      %v428 = vunpack.c.l.b16 %v396
      %v429 = vunpack.c.l.b16 %v397
      %v430 = vunpack.c.l.b16 %v398
      %v431 = vunpack.c.l.b16 %v399
      %v432 = vunpack.c.l.b16 %v400
      %v433 = vunpack.c.l.b16 %v401
      %v434 = vunpack.c.l.b16 %v402
      %v435 = vunpack.c.l.b16 %v403
      %v436 = vunpack.c.l.b16 %v404
      %v437 = vunpack.c.l.b16 %v405
      %v438 = vunpack.c.l.b16 %v406
      %v439 = vunpack.c.l.b16 %v407
      %v440 = vunpack.c.l.b16 %v408
      %v441 = vpack.c.b16 %v426, %v425
      %v442 = vpack.c.b16 %v428, %v427
      %v443 = vpack.c.b16 %v430, %v429
      %v444 = vpack.c.b16 %v432, %v431
      %v445 = vpack.c.b16 %v434, %v433
      %v446 = vpack.c.b16 %v436, %v435
      %v447 = vpack.c.b16 %v438, %v437
      %v448 = vpack.c.b16 %v440, %v439
      %457 = vmatprep.subr.bf16.mxu0 0
      %458 = vmatpush1.bf16.msra.mxu0 %v441
      %459 = vmatprep.subr.bf16.mxu0 0
      %460 = vmatpush1.bf16.msra.mxu0 %v442
      %461 = vmatprep.subr.bf16.mxu0 0
      %462 = vmatpush1.bf16.msra.mxu0 %v443
      %463 = vmatprep.subr.bf16.mxu0 0
      %464 = vmatpush1.bf16.msra.mxu0 %v444
      %465 = vmatprep.subr.bf16.mxu0 0
      %466 = vmatpush1.bf16.msra.mxu0 %v445
      %467 = vmatprep.subr.bf16.mxu0 0
      %468 = vmatpush1.bf16.msra.mxu0 %v446
      %469 = vmatprep.subr.bf16.mxu0 0
      %470 = vmatpush1.bf16.msra.mxu0 %v447
      %471 = vmatprep.subr.bf16.mxu0 0
      %472 = vmatpush1.bf16.msra.mxu0 %v448
      %473 = vmatprep.subr.bf16.mxu0 0
      %474 = vmatpush1.bf16.msra.mxu0 0
      %475 = vmatprep.subr.bf16.mxu0 0
      %476 = vmatpush1.bf16.msra.mxu0 0
      %477 = vmatprep.subr.bf16.mxu0 0
      %478 = vmatpush1.bf16.msra.mxu0 0
      %479 = vmatprep.subr.bf16.mxu0 0
      %480 = vmatpush1.bf16.msra.mxu0 0
      %481 = vmatprep.subr.bf16.mxu0 0
      %482 = vmatpush1.bf16.msra.mxu0 0
      %483 = vmatprep.subr.bf16.mxu0 0
      %484 = vmatpush1.bf16.msra.mxu0 0
      %485 = vmatprep.subr.bf16.mxu0 0
      %486 = vmatpush1.bf16.msra.mxu0 0
      %487 = vmatprep.subr.bf16.mxu0 0
      %488 = vmatpush1.bf16.msra.mxu0 0
      %489 = vmatprep.mubr.bf16.mxu0 0
      %490 = vmatmul.mubr.bf16.gmra.mrb[0].mxu0 %v385
      %v491 = vpop.f32.mrb[0].mxu0
      %v492 = vadd.f32 0.0, %v491
      %v493 = vpop.f32.mrb[0].mxu0
      %v494 = vpop.f32.mrb[0].mxu0
      %v495 = vadd.f32 0.0, %v494
      %v496 = vpop.f32.mrb[0].mxu0
      %497 = vmatprep.mubr.bf16.mxu0 0
      %498 = vmatmul.mubr.bf16.gmra.mrb[0].mxu0 %v386
      %v499 = vpop.f32.mrb[0].mxu0
      %v500 = vadd.f32 0.0, %v499
      %v501 = vpop.f32.mrb[0].mxu0
      %v502 = vpop.f32.mrb[0].mxu0
      %v503 = vadd.f32 0.0, %v502
      %v504 = vpop.f32.mrb[0].mxu0
      %505 = vmatprep.mubr.bf16.mxu0 0
      %506 = vmatmul.mubr.bf16.gmra.mrb[0].mxu0 %v387
      %v507 = vpop.f32.mrb[0].mxu0
      %v508 = vadd.f32 0.0, %v507
      %v509 = vpop.f32.mrb[0].mxu0
      %v510 = vpop.f32.mrb[0].mxu0
      %v511 = vadd.f32 0.0, %v510
      %v512 = vpop.f32.mrb[0].mxu0
      %513 = vmatprep.mubr.bf16.mxu0 0
      %514 = vmatmul.mubr.bf16.gmra.mrb[0].mxu0 %v388
      %v515 = vpop.f32.mrb[0].mxu0
      %v516 = vadd.f32 0.0, %v515
      %v517 = vpop.f32.mrb[0].mxu0
      %v518 = vpop.f32.mrb[0].mxu0
      %v519 = vadd.f32 0.0, %v518
      %v520 = vpop.f32.mrb[0].mxu0
      %521 = vmatprep.mubr.bf16.mxu0 0
      %522 = vmatmul.mubr.bf16.gmra.mrb[0].mxu0 %v389
      %v523 = vpop.f32.mrb[0].mxu0
      %v524 = vadd.f32 0.0, %v523
      %v525 = vpop.f32.mrb[0].mxu0
      %v526 = vpop.f32.mrb[0].mxu0
      %v527 = vadd.f32 0.0, %v526
      %v528 = vpop.f32.mrb[0].mxu0
      %529 = vmatprep.mubr.bf16.mxu0 0
      %530 = vmatmul.mubr.bf16.gmra.mrb[0].mxu0 %v390
      %v531 = vpop.f32.mrb[0].mxu0
      %v532 = vadd.f32 0.0, %v531
      %v533 = vpop.f32.mrb[0].mxu0
      %v534 = vpop.f32.mrb[0].mxu0
      %v535 = vadd.f32 0.0, %v534
      %v536 = vpop.f32.mrb[0].mxu0
      %537 = vmatprep.mubr.bf16.mxu0 0
      %538 = vmatmul.mubr.bf16.gmra.mrb[0].mxu0 %v391
      %v539 = vpop.f32.mrb[0].mxu0
      %v540 = vadd.f32 0.0, %v539
      %v541 = vpop.f32.mrb[0].mxu0
      %v542 = vpop.f32.mrb[0].mxu0
      %v543 = vadd.f32 0.0, %v542
      %v544 = vpop.f32.mrb[0].mxu0
      %545 = vmatprep.mubr.bf16.mxu0 0
      %546 = vmatmul.mubr.bf16.gmra.mrb[0].mxu0 %v392
      %v547 = vpop.f32.mrb[0].mxu0
      %v548 = vadd.f32 0.0, %v547
      %v549 = vpop.f32.mrb[0].mxu0
      %v550 = vpop.f32.mrb[0].mxu0
      %v551 = vadd.f32 0.0, %v550
      %v552 = vpop.f32.mrb[0].mxu0
      %553 = vdwg.mxu0
      %v554 = vmax.f32 %v492, 0.0
      %v555 = vmax.f32 %v495, 0.0
      %v556 = vmax.f32 %v500, 0.0
      %v557 = vmax.f32 %v503, 0.0
      %v558 = vmax.f32 %v508, 0.0
      %v559 = vmax.f32 %v511, 0.0
      %v560 = vmax.f32 %v516, 0.0
      %v561 = vmax.f32 %v519, 0.0
      %v562 = vmax.f32 %v524, 0.0
      %v563 = vmax.f32 %v527, 0.0
      %v564 = vmax.f32 %v532, 0.0
      %v565 = vmax.f32 %v535, 0.0
      %v566 = vmax.f32 %v540, 0.0
      %v567 = vmax.f32 %v543, 0.0
      %v568 = vmax.f32 %v548, 0.0
      %v569 = vmax.f32 %v551, 0.0
      %570 = vst.msk [vmem:[%s172] sm:$0xff] %vm247, %v554
      %571 = vst.msk [vmem:[%s172 + $0x8] sm:$0xff] %vm247, %v555
      %572 = vst.msk [vmem:[%s172 + $0x10] sm:$0xff] %vm247, %v556
      %573 = vst.msk [vmem:[%s172 + $0x18] sm:$0xff] %vm247, %v557
      %574 = vst.msk [vmem:[%s172 + $0x20] sm:$0xff] %vm247, %v558
      %575 = vst.msk [vmem:[%s172 + $0x28] sm:$0xff] %vm247, %v559
      %576 = vst.msk [vmem:[%s172 + $0x30] sm:$0xff] %vm247, %v560
      %577 = vst.msk [vmem:[%s172 + $0x38] sm:$0xff] %vm247, %v561
      %578 = vst.msk [vmem:[%s172 + $0x40] sm:$0xff] %vm247, %v562
      %579 = vst.msk [vmem:[%s172 + $0x48] sm:$0xff] %vm247, %v563
      %580 = vst.msk [vmem:[%s172 + $0x50] sm:$0xff] %vm247, %v564
      %581 = vst.msk [vmem:[%s172 + $0x58] sm:$0xff] %vm247, %v565
      %582 = vst.msk [vmem:[%s172 + $0x60] sm:$0xff] %vm247, %v566
      %583 = vst.msk [vmem:[%s172 + $0x68] sm:$0xff] %vm247, %v567
      %584 = vst.msk [vmem:[%s172 + $0x70] sm:$0xff] %vm247, %v568
      %585 = vst.msk [vmem:[%s172 + $0x78] sm:$0xff] %vm247, %v569
      %s586 = smul.u32 16, %s14
      %p587 = scmp.lt.s32.totalorder %s586, 31
      %s588 = scalar_select %p587, %s586, 31
      %s589 = smul.addr %s588, 8
      %s590 = scalar_lea.vmem %s3, %s589
      // Predicated region
      $region33: #{tpu_custom_call.1} parent=31 // pred_check
        %p591 = pneg %p100
      $region34: #{tpu_custom_call.1} parent=31 // pred_check_branch
        %593 = sbr.rel (%p591) target = $region36
      $region35: #{tpu_custom_call.1} parent=31 // pred_region
        %s594 = smul.u32 16, %s14
      $region36: #{tpu_custom_call.1} parent=31 // pred_fallthru
        _
    $region32: #{tpu_custom_call.1} parent=5 // pred_fallthru
      _
    %p595 = scmp.le.s32.totalorder 2, %s9
    // Predicated region
    $region37: #{tpu_custom_call.1} parent=5 // pred_check
      %p596 = pneg %p595
    $region38: #{tpu_custom_call.1} parent=5 // pred_check_branch
      %598 = sbr.rel (%p596) target = $region40
    $region39: #{tpu_custom_call.1} parent=5 // pred_region
      %s599 = ssub.s32 %s9, 2
      // Predicated region
      $region41: #{tpu_custom_call.1} parent=39 // pred_check
        %p600 = pneg %p106
      $region42: #{tpu_custom_call.1} parent=39 // pred_check_branch
        %602 = sbr.rel (%p600) target = $region44
      $region43: #{tpu_custom_call.1} parent=39 // pred_region
        %s603 = smul.u32 16, %s15
        %p604 = scmp.lt.s32.totalorder %s603, 31
        %s605 = scalar_select %p604, %s603, 31
        %s606 = smul.addr %s605, 8
        %s607 = scalar_lea.vmem %s3, %s606
      $region44: #{tpu_custom_call.1} parent=39 // pred_fallthru
        _
    $region40: #{tpu_custom_call.1} parent=5 // pred_fallthru
      _
  $region6: #{tpu_custom_call.1} parent=0 // loop_footer
    %s13 = sadd.s32 1, %s9
  $region7: #{tpu_custom_call.1} parent=0 // loop_footer_branch
    %8 = sbr.rel target = $region3
  $region8: #{tpu_custom_call.1} parent=0 // loop_exit
    _

</llo_original>
